<compile_context>
chip_gen: v5e
topology: v5e:2x2
jax: 0.10.0
libtpu: 0.0.40
codegen_flags: <defaults>
</compile_context>

<pallas_src>
import jax
import jax.numpy as jnp
from jax import lax
from jax.experimental import pallas as pl
from jax.experimental.pallas import tpu as pltpu


def _round_up(x, m):
    return ((x + m - 1) // m) * m


def abmil_kernel(n_ref,                      # SMEM (1,) int32 : true bag size N
                 x_ref,                      # (TN, Cp)        : instance tile (f32 or bf16)
                 w1_ref, b1_ref,             # (Cp, Ep) bf16, (1, Ep) f32
                 w2_ref, b2_ref,             # (Ep, Hp) bf16, (1, Hp) f32
                 w3_ref,                     # (1, Hp)  f32    : fc3 weight row
                 wc_ref, bc_ref,             # (1, Ep)  f32, (1, 1) f32
                 risk_ref,                   # (1, 1)   f32 output
                 m_scr, l_scr, z_scr):       # VMEM scratch (1,1),(1,1),(1,Ep)
    i = pl.program_id(0)
    tn = x_ref.shape[0]

    @pl.when(i == 0)
    def _init():
        m_scr[...] = jnp.full(m_scr.shape, -jnp.inf, dtype=m_scr.dtype)
        l_scr[...] = jnp.zeros(l_scr.shape, dtype=l_scr.dtype)
        z_scr[...] = jnp.zeros(z_scr.shape, dtype=z_scr.dtype)

    # Instance-validity mask: the last tile can extend past the true bag size
    # (no wrapper-side N padding), so rows >= N carry garbage and get masked.
    row = i * tn + lax.broadcasted_iota(jnp.int32, (tn, 1), 0)
    valid = row < n_ref[0]

    # fc1 + relu (dropout1 = identity at inference).  bf16 MXU, f32 accumulate.
    xb = x_ref[...].astype(jnp.bfloat16)
    h = jnp.dot(xb, w1_ref[...], preferred_element_type=jnp.float32)
    h = jnp.maximum(h + b1_ref[...], 0.0)                         # (TN, Ep) f32
    # Zero out padded rows so garbage from the partially-OOB tile stays finite
    # (0 * e is then exactly 0 in the pooled sum).
    h = jnp.where(valid, h, 0.0)

    # fc2 + tanh (dropout2 = identity).  Single hoisted bf16 cast of h.
    a = jnp.dot(h.astype(jnp.bfloat16), w2_ref[...],
                preferred_element_type=jnp.float32)
    a = jnp.tanh(a + b2_ref[...])                                 # (TN, Hp) f32

    # fc3 (no bias): attention logits.  Lane-width-1 matmul replaced by a
    # VPU multiply + lane reduction (keeps MXU free, no (N,1) masked stores).
    s = jnp.sum(a * w3_ref[...], axis=-1, keepdims=True)          # (TN, 1) f32
    s = jnp.where(valid, s, -jnp.inf)

    # Online (flash-style) softmax accumulation, normalisation deferred.
    m_old = m_scr[...]                                            # (1, 1)
    m_new = jnp.maximum(m_old, jnp.max(s, axis=0, keepdims=True))
    alpha = jnp.exp(m_old - m_new)                                # (1, 1)
    e = jnp.exp(s - m_new)                                        # (TN, 1) f32
    l_scr[...] = alpha * l_scr[...] + jnp.sum(e, axis=0, keepdims=True)
    # Pooled weighted embedding sum: f32 VPU multiply + cross-sublane reduce.
    # (The former M=1 MXU matmul cost ~as much MXU time as h@W2; removed.)
    z_scr[...] = alpha * z_scr[...] + jnp.sum(e * h, axis=0, keepdims=True)
    m_scr[...] = m_new

    @pl.when(i == pl.num_programs(0) - 1)
    def _finalize():
        z = z_scr[...] / l_scr[...]                               # exact divide
        # classifier head: (1,Ep)·(Ep,1) -> VPU mul + lane reduce.
        risk_ref[...] = (jnp.sum(z * wc_ref[...], axis=-1, keepdims=True)
                         + bc_ref[...])


def _device_tile_defaults():
    """Generation-aware (block_n, vmem_limit_bytes, device_kind) defaults."""
    try:
        kind = jax.devices()[0].device_kind.lower()
    except Exception:
        kind = ""
    if "v7" in kind:
        # v7x: 64 MiB physical VMEM -> cap tile size and scoped-VMEM budget.
        return 1024, 48 * 1024 * 1024, kind
    if "v5" in kind or "v6" in kind:
        # v5e/v6e(/v5p): 128 MiB physical VMEM -> grow tiles to hide x DMA.
        return 2048, 96 * 1024 * 1024, kind
    return 1024, 48 * 1024 * 1024, kind


def abmil_forward(x, params, *, block_n=None, vmem_limit_bytes=None):
    """x: (N, C) float32; params: dict of pre-transposed (in, out) weights."""
    N, C = x.shape
    w1, b1 = params["w1"], params["b1"]
    w2, b2 = params["w2"], params["b2"]
    w3, wc, bc = params["w3"], params["wc"], params["bc"]
    E, H = w1.shape[1], w2.shape[1]

    default_bn, default_vmem, kind = _device_tile_defaults()
    if block_n is None:
        block_n = default_bn
    if vmem_limit_bytes is None:
        vmem_limit_bytes = default_vmem

    f32, bf16 = jnp.float32, jnp.bfloat16

    # Lane-dense padding only for the tiny, VMEM-resident weights/biases.
    Ep, Hp = _round_up(E, 128), _round_up(H, 128)

    # x streams straight from HBM (no extra pad/cast pass over the bag, which
    # would be an un-hidden read+write of the whole x).  Only when C is not
    # sublane-pack aligned do we materialize a padded copy, and only to the
    # next multiple of 16 (bf16 packing), not 128.
    if C % 16 == 0:
        Cp, x_in = C, x                      # no copy; cast to bf16 in-kernel
    else:
        Cp = _round_up(C, 16)
        x_in = jnp.zeros((N, Cp), bf16).at[:, :C].set(x.astype(bf16))

    w1_p = jnp.zeros((Cp, Ep), bf16).at[:C, :E].set(w1.astype(bf16))
    b1_p = jnp.zeros((1, Ep), f32).at[:, :E].set(b1.reshape(1, E).astype(f32))
    w2_p = jnp.zeros((Ep, Hp), bf16).at[:E, :H].set(w2.astype(bf16))
    b2_p = jnp.zeros((1, Hp), f32).at[:, :H].set(b2.reshape(1, H).astype(f32))
    w3_p = jnp.zeros((1, Hp), f32).at[:, :H].set(w3.reshape(1, H).astype(f32))
    wc_p = jnp.zeros((1, Ep), f32).at[:, :E].set(wc.reshape(1, E).astype(f32))
    bc_p = bc.reshape(1, 1).astype(f32)
    n_actual = jnp.array([N], dtype=jnp.int32)

    # Instance tile (multiple of 8); ragged last tile handled in-kernel.
    tn = max(8, _round_up(min(block_n, N), 8))
    grid = (pl.cdiv(N, tn),)

    const = lambda i, n: (0, 0)
    resident = pl.Buffered(1)                       # single-buffered residents
    x_buf = pl.Buffered(3) if "v5" in kind else pl.Buffered(2)

    grid_spec = pltpu.PrefetchScalarGridSpec(
        num_scalar_prefetch=1,
        grid=grid,
        in_specs=[
            pl.BlockSpec((tn, Cp), lambda i, n: (i, 0),
                         pipeline_mode=x_buf),       # x tile (only stream)
            pl.BlockSpec((Cp, Ep), const, pipeline_mode=resident),  # w1
            pl.BlockSpec((1, Ep), const, pipeline_mode=resident),   # b1
            pl.BlockSpec((Ep, Hp), const, pipeline_mode=resident),  # w2
            pl.BlockSpec((1, Hp), const, pipeline_mode=resident),   # b2
            pl.BlockSpec((1, Hp), const, pipeline_mode=resident),   # w3 (row)
            pl.BlockSpec((1, Ep), const, pipeline_mode=resident),   # wc (row)
            pl.BlockSpec((1, 1), const, pipeline_mode=resident),    # bc
        ],
        out_specs=pl.BlockSpec((1, 1), const),
        scratch_shapes=[
            pltpu.VMEM((1, 1), f32),    # running max m
            pltpu.VMEM((1, 1), f32),    # running (unnormalised) denominator l
            pltpu.VMEM((1, Ep), f32),   # running unnormalised weighted sum z
        ],
    )
    risk = pl.pallas_call(
        abmil_kernel,
        out_shape=jax.ShapeDtypeStruct((1, 1), f32),
        grid_spec=grid_spec,
        compiler_params=pltpu.CompilerParams(
            # The N axis carries the online-softmax accumulator -> sequential.
            dimension_semantics=("arbitrary",),
            vmem_limit_bytes=vmem_limit_bytes,
        ),
    )(n_actual, x_in, w1_p, b1_p, w2_p, b2_p, w3_p, wc_p, bc_p)
    return risk[0, 0]  # scalar, matches torch .squeeze()


def init_params(key, C, hidden=128, embed_dim=128):
    """Deterministic synthetic parameters with nn.Linear-like uniform init,
    stored pre-transposed as (in, out)."""
    ks = jax.random.split(key, 7)

    def uniform(k, shape, fan_in):
        bound = 1.0 / jnp.sqrt(fan_in)
        return jax.random.uniform(k, shape, jnp.float32, -bound, bound)

    return {
        "w1": uniform(ks[0], (C, embed_dim), C),
        "b1": uniform(ks[1], (1, embed_dim), C),
        "w2": uniform(ks[2], (embed_dim, hidden), embed_dim),
        "b2": uniform(ks[3], (1, hidden), embed_dim),
        "w3": uniform(ks[4], (hidden, 1), hidden),          # fc3, bias=False
        "wc": uniform(ks[5], (embed_dim, 1), embed_dim),
        "bc": uniform(ks[6], (1, 1), embed_dim),
    }


def abmil_reference(x, p):
    """Pure-JAX f32 reference for a sanity check."""
    h = jnp.maximum(x @ p["w1"] + p["b1"], 0.0)
    a = jnp.tanh(h @ p["w2"] + p["b2"])
    s = a @ p["w3"]
    w = jax.nn.softmax(s, axis=0)
    z = jnp.sum(w * h, axis=0, keepdims=True)
    return (z @ p["wc"] + p["bc"])[0, 0]


if __name__ == "__main__":
    key = jax.random.PRNGKey(0)
    k_x, k_p, k_x2, k_p2 = jax.random.split(key, 4)

    # Case 1: small bag, tiny C (padded-C path).  N=20 instances, C=4, E=H=32.
    # block_n=8 -> 3-step grid with a ragged last tile (4 masked garbage rows),
    # exercising the online softmax + in-kernel validity mask.
    N, C, E, H = 20, 4, 32, 32
    x = jax.random.normal(k_x, (N, C), dtype=jnp.float32)
    params = init_params(k_p, C, hidden=H, embed_dim=E)
    ref = abmil_reference(x, params)

    risk_small = abmil_forward(x, params, block_n=8)
    jax.block_until_ready(risk_small)
    assert jnp.allclose(risk_small, ref, atol=3e-2, rtol=3e-2), (risk_small, ref)

    # Same bag with device-default tiling (single ragged tile).
    risk_big = abmil_forward(x, params)
    jax.block_until_ready(risk_big)
    assert jnp.allclose(risk_big, ref, atol=3e-2, rtol=3e-2), (risk_big, ref)

    # Case 2: C aligned to 16 -> x streams directly from HBM with no copy.
    N2, C2 = 20, 32
    x2 = jax.random.normal(k_x2, (N2, C2), dtype=jnp.float32)
    params2 = init_params(k_p2, C2, hidden=H, embed_dim=E)
    ref2 = abmil_reference(x2, params2)

    risk2 = abmil_forward(x2, params2, block_n=8)
    jax.block_until_ready(risk2)
    assert jnp.allclose(risk2, ref2, atol=3e-2, rtol=3e-2), (risk2, ref2)

    print("KERNEL_OK")
</pallas_src>

<mosaic_0001>
module attributes {stable_mosaic.version = 11 : i64} {
  func.func @abmil_kernel(%arg0: i32, %arg1: memref<1xi32, #tpu.memory_space<smem>>, %arg2: memref<8x16xbf16, #tpu.memory_space<vmem>>, %arg3: memref<16x128xbf16, #tpu.memory_space<vmem>>, %arg4: memref<1x128xf32, #tpu.memory_space<vmem>>, %arg5: memref<128x128xbf16, #tpu.memory_space<vmem>>, %arg6: memref<1x128xf32, #tpu.memory_space<vmem>>, %arg7: memref<1x128xf32, #tpu.memory_space<vmem>>, %arg8: memref<1x128xf32, #tpu.memory_space<vmem>>, %arg9: memref<1x1xf32, #tpu.memory_space<vmem>>, %arg10: memref<1x1xf32, #tpu.memory_space<vmem>>, %arg11: memref<1x1xf32, #tpu.memory_space<vmem>>, %arg12: memref<1x1xf32, #tpu.memory_space<vmem>>, %arg13: memref<1x128xf32, #tpu.memory_space<vmem>>) attributes {dimension_semantics = [#tpu.dimension_semantics<arbitrary>], iteration_bounds = array<i64: 3>, scalar_prefetch = 1 : i64, scratch_operands = 3 : i64, tpu.core_type = #tpu.core_type<tc>, window_params = [{pipeline_mode = #tpu.pipeline_mode<double_buffered>, transform_indices = @transform_0, window_bounds = array<i64: 8, 16>}, {pipeline_mode = #tpu.pipeline_mode<synchronous>, transform_indices = @transform_1, window_bounds = array<i64: 16, 128>}, {pipeline_mode = #tpu.pipeline_mode<synchronous>, transform_indices = @transform_2, window_bounds = array<i64: 1, 128>}, {pipeline_mode = #tpu.pipeline_mode<synchronous>, transform_indices = @transform_3, window_bounds = array<i64: 128, 128>}, {pipeline_mode = #tpu.pipeline_mode<synchronous>, transform_indices = @transform_4, window_bounds = array<i64: 1, 128>}, {pipeline_mode = #tpu.pipeline_mode<synchronous>, transform_indices = @transform_5, window_bounds = array<i64: 1, 128>}, {pipeline_mode = #tpu.pipeline_mode<synchronous>, transform_indices = @transform_6, window_bounds = array<i64: 1, 128>}, {pipeline_mode = #tpu.pipeline_mode<synchronous>, transform_indices = @transform_7, window_bounds = array<i64: 1, 1>}, {pipeline_mode = #tpu.pipeline_mode<synchronous>, transform_indices = @transform_8, window_bounds = array<i64: 1, 1>}]} {
    %c0_i32 = arith.constant 0 : i32
    %0 = arith.cmpi eq, %arg0, %c0_i32 : i32
    %1 = arith.extui %0 : i1 to i32
    %c0_i32_0 = arith.constant 0 : i32
    %2 = arith.cmpi ne, %1, %c0_i32_0 : i32
    scf.if %2 {
      %cst_34 = arith.constant 0xFF800000 : f32
      %64 = vector.broadcast %cst_34 : f32 to vector<1x1xf32>
      %c0_35 = arith.constant 0 : index
      %c0_36 = arith.constant 0 : index
      %65 = vector.load %arg11[%c0_35, %c0_36] : memref<1x1xf32, #tpu.memory_space<vmem>>, vector<1x1xf32>
      tpu.vector_store %arg11[%c0_35, %c0_36], %64 {strides = array<i32>} : memref<1x1xf32, #tpu.memory_space<vmem>>, vector<1x1xf32>,
      %cst_37 = arith.constant 0.000000e+00 : f32
      %66 = vector.broadcast %cst_37 : f32 to vector<1x1xf32>
      %c0_38 = arith.constant 0 : index
      %c0_39 = arith.constant 0 : index
      %67 = vector.load %arg12[%c0_38, %c0_39] : memref<1x1xf32, #tpu.memory_space<vmem>>, vector<1x1xf32>
      tpu.vector_store %arg12[%c0_38, %c0_39], %66 {strides = array<i32>} : memref<1x1xf32, #tpu.memory_space<vmem>>, vector<1x1xf32>,
      %cst_40 = arith.constant 0.000000e+00 : f32
      %68 = vector.broadcast %cst_40 : f32 to vector<1x128xf32>
      %c0_41 = arith.constant 0 : index
      %c0_42 = arith.constant 0 : index
      %69 = vector.load %arg13[%c0_41, %c0_42] : memref<1x128xf32, #tpu.memory_space<vmem>>, vector<1x128xf32>
      tpu.vector_store %arg13[%c0_41, %c0_42], %68 {strides = array<i32>} : memref<1x128xf32, #tpu.memory_space<vmem>>, vector<1x128xf32>,
    } else {
    }
    %c8_i32 = arith.constant 8 : i32
    %3 = arith.muli %arg0, %c8_i32 : i32
    %4 = tpu.iota {dimensions = array<i32: 0>} : vector<8x1xi32>
    %5 = vector.broadcast %3 : i32 to vector<8x1xi32>
    %6 = arith.addi %5, %4 : vector<8x1xi32>
    %c0 = arith.constant 0 : index
    %7 = memref.load %arg1[%c0] : memref<1xi32, #tpu.memory_space<smem>>
    %8 = vector.broadcast %7 : i32 to vector<8x1xi32>
    %9 = arith.cmpi slt, %6, %8 : vector<8x1xi32>
    %c0_1 = arith.constant 0 : index
    %c0_2 = arith.constant 0 : index
    %10 = vector.load %arg2[%c0_1, %c0_2] : memref<8x16xbf16, #tpu.memory_space<vmem>>, vector<8x16xbf16>
    %c0_3 = arith.constant 0 : index
    %c0_4 = arith.constant 0 : index
    %11 = vector.load %arg3[%c0_3, %c0_4] : memref<16x128xbf16, #tpu.memory_space<vmem>>, vector<16x128xbf16>
    %cst = arith.constant dense<0.000000e+00> : vector<8x128xf32>
    %12 = tpu.matmul %10, %11, %cst {dimension_numbers = #tpu.dot_dimension_numbers<[1], [0], [0], [1], [0, 0, 1, 1], [], []>} : vector<8x16xbf16>, vector<16x128xbf16>, vector<8x128xf32> -> vector<8x128xf32>
    %c0_5 = arith.constant 0 : index
    %c0_6 = arith.constant 0 : index
    %13 = vector.load %arg4[%c0_5, %c0_6] : memref<1x128xf32, #tpu.memory_space<vmem>>, vector<1x128xf32>
    %14 = vector.broadcast %13 : vector<1x128xf32> to vector<8x128xf32>
    %15 = arith.addf %12, %14 : vector<8x128xf32>
    %cst_7 = arith.constant 0.000000e+00 : f32
    %16 = vector.broadcast %cst_7 : f32 to vector<8x128xf32>
    %17 = arith.maximumf %15, %16 : vector<8x128xf32>
    %cst_8 = arith.constant 0.000000e+00 : f32
    %18 = vector.shape_cast %9 : vector<8x1xi1> to vector<8x1xi1>
    %19 = vector.broadcast %18 : vector<8x1xi1> to vector<8x128xi1>
    %20 = vector.broadcast %cst_8 : f32 to vector<8x128xf32>
    %21 = arith.select %19, %17, %20 : vector<8x128xi1>, vector<8x128xf32>
    %22 = arith.truncf %21 : vector<8x128xf32> to vector<8x128xbf16>
    %c0_9 = arith.constant 0 : index
    %c0_10 = arith.constant 0 : index
    %23 = vector.load %arg5[%c0_9, %c0_10] : memref<128x128xbf16, #tpu.memory_space<vmem>>, vector<128x128xbf16>
    %cst_11 = arith.constant dense<0.000000e+00> : vector<8x128xf32>
    %24 = tpu.matmul %22, %23, %cst_11 {dimension_numbers = #tpu.dot_dimension_numbers<[1], [0], [0], [1], [0, 0, 1, 1], [], []>} : vector<8x128xbf16>, vector<128x128xbf16>, vector<8x128xf32> -> vector<8x128xf32>
    %c0_12 = arith.constant 0 : index
    %c0_13 = arith.constant 0 : index
    %25 = vector.load %arg6[%c0_12, %c0_13] : memref<1x128xf32, #tpu.memory_space<vmem>>, vector<1x128xf32>
    %26 = vector.broadcast %25 : vector<1x128xf32> to vector<8x128xf32>
    %27 = arith.addf %24, %26 : vector<8x128xf32>
    %28 = math.tanh %27 : vector<8x128xf32>
    %c0_14 = arith.constant 0 : index
    %c0_15 = arith.constant 0 : index
    %29 = vector.load %arg7[%c0_14, %c0_15] : memref<1x128xf32, #tpu.memory_space<vmem>>, vector<1x128xf32>
    %30 = vector.broadcast %29 : vector<1x128xf32> to vector<8x128xf32>
    %31 = arith.mulf %28, %30 : vector<8x128xf32>
    %cst_16 = arith.constant dense<0.000000e+00> : vector<8xf32>
    %32 = vector.multi_reduction <add>, %31, %cst_16 [1] : vector<8x128xf32> to vector<8xf32>
    %33 = vector.shape_cast %32 : vector<8xf32> to vector<8x1xf32>
    %cst_17 = arith.constant 0xFF800000 : f32
    %34 = vector.broadcast %cst_17 : f32 to vector<8x1xf32>
    %35 = arith.select %9, %33, %34 : vector<8x1xi1>, vector<8x1xf32>
    %c0_18 = arith.constant 0 : index
    %c0_19 = arith.constant 0 : index
    %36 = vector.load %arg11[%c0_18, %c0_19] : memref<1x1xf32, #tpu.memory_space<vmem>>, vector<1x1xf32>
    %cst_20 = arith.constant dense<0xFF800000> : vector<1xf32>
    %37 = vector.multi_reduction <maximumf>, %35, %cst_20 [0] : vector<8x1xf32> to vector<1xf32>
    %38 = vector.shape_cast %37 : vector<1xf32> to vector<1x1xf32>
    %39 = arith.maximumf %36, %38 : vector<1x1xf32>
    %40 = arith.subf %36, %39 : vector<1x1xf32>
    %41 = math.exp %40 : vector<1x1xf32>
    %42 = vector.broadcast %39 : vector<1x1xf32> to vector<8x1xf32>
    %43 = arith.subf %35, %42 : vector<8x1xf32>
    %44 = math.exp %43 : vector<8x1xf32>
    %c0_21 = arith.constant 0 : index
    %c0_22 = arith.constant 0 : index
    %45 = vector.load %arg12[%c0_21, %c0_22] : memref<1x1xf32, #tpu.memory_space<vmem>>, vector<1x1xf32>
    %46 = arith.mulf %41, %45 : vector<1x1xf32>
    %cst_23 = arith.constant dense<0.000000e+00> : vector<1xf32>
    %47 = vector.multi_reduction <add>, %44, %cst_23 [0] : vector<8x1xf32> to vector<1xf32>
    %48 = vector.shape_cast %47 : vector<1xf32> to vector<1x1xf32>
    %49 = arith.addf %46, %48 : vector<1x1xf32>
    %c0_24 = arith.constant 0 : index
    %c0_25 = arith.constant 0 : index
    %50 = vector.load %arg12[%c0_24, %c0_25] : memref<1x1xf32, #tpu.memory_space<vmem>>, vector<1x1xf32>
    tpu.vector_store %arg12[%c0_24, %c0_25], %49 {strides = array<i32>} : memref<1x1xf32, #tpu.memory_space<vmem>>, vector<1x1xf32>,
    %c0_26 = arith.constant 0 : index
    %c0_27 = arith.constant 0 : index
    %51 = vector.load %arg13[%c0_26, %c0_27] : memref<1x128xf32, #tpu.memory_space<vmem>>, vector<1x128xf32>
    %52 = vector.broadcast %41 : vector<1x1xf32> to vector<1x128xf32>
    %53 = arith.mulf %52, %51 : vector<1x128xf32>
    %54 = vector.broadcast %44 : vector<8x1xf32> to vector<8x128xf32>
    %55 = arith.mulf %54, %21 : vector<8x128xf32>
    %cst_28 = arith.constant dense<0.000000e+00> : vector<128xf32>
    %56 = vector.multi_reduction <add>, %55, %cst_28 [0] : vector<8x128xf32> to vector<128xf32>
    %57 = vector.shape_cast %56 : vector<128xf32> to vector<1x128xf32>
    %58 = arith.addf %53, %57 : vector<1x128xf32>
    %c0_29 = arith.constant 0 : index
    %c0_30 = arith.constant 0 : index
    %59 = vector.load %arg13[%c0_29, %c0_30] : memref<1x128xf32, #tpu.memory_space<vmem>>, vector<1x128xf32>
    tpu.vector_store %arg13[%c0_29, %c0_30], %58 {strides = array<i32>} : memref<1x128xf32, #tpu.memory_space<vmem>>, vector<1x128xf32>,
    %c0_31 = arith.constant 0 : index
    %c0_32 = arith.constant 0 : index
    %60 = vector.load %arg11[%c0_31, %c0_32] : memref<1x1xf32, #tpu.memory_space<vmem>>, vector<1x1xf32>
    tpu.vector_store %arg11[%c0_31, %c0_32], %39 {strides = array<i32>} : memref<1x1xf32, #tpu.memory_space<vmem>>, vector<1x1xf32>,
    %c2_i32 = arith.constant 2 : i32
    %61 = arith.cmpi eq, %arg0, %c2_i32 : i32
    %62 = arith.extui %61 : i1 to i32
    %c0_i32_33 = arith.constant 0 : i32
    %63 = arith.cmpi ne, %62, %c0_i32_33 : i32
    scf.if %63 {
      %c0_34 = arith.constant 0 : index
      %c0_35 = arith.constant 0 : index
      %64 = vector.load %arg13[%c0_34, %c0_35] : memref<1x128xf32, #tpu.memory_space<vmem>>, vector<1x128xf32>
      %c0_36 = arith.constant 0 : index
      %c0_37 = arith.constant 0 : index
      %65 = vector.load %arg12[%c0_36, %c0_37] : memref<1x1xf32, #tpu.memory_space<vmem>>, vector<1x1xf32>
      %66 = vector.broadcast %65 : vector<1x1xf32> to vector<1x128xf32>
      %67 = arith.divf %64, %66 : vector<1x128xf32>
      %c0_38 = arith.constant 0 : index
      %c0_39 = arith.constant 0 : index
      %68 = vector.load %arg8[%c0_38, %c0_39] : memref<1x128xf32, #tpu.memory_space<vmem>>, vector<1x128xf32>
      %69 = arith.mulf %67, %68 : vector<1x128xf32>
      %cst_40 = arith.constant dense<0.000000e+00> : vector<1xf32>
      %70 = vector.multi_reduction <add>, %69, %cst_40 [1] : vector<1x128xf32> to vector<1xf32>
      %71 = vector.shape_cast %70 : vector<1xf32> to vector<1x1xf32>
      %c0_41 = arith.constant 0 : index
      %c0_42 = arith.constant 0 : index
      %72 = vector.load %arg9[%c0_41, %c0_42] : memref<1x1xf32, #tpu.memory_space<vmem>>, vector<1x1xf32>
      %73 = arith.addf %71, %72 : vector<1x1xf32>
      %c0_43 = arith.constant 0 : index
      %c0_44 = arith.constant 0 : index
      %74 = vector.load %arg10[%c0_43, %c0_44] : memref<1x1xf32, #tpu.memory_space<vmem>>, vector<1x1xf32>
      tpu.vector_store %arg10[%c0_43, %c0_44], %73 {strides = array<i32>} : memref<1x1xf32, #tpu.memory_space<vmem>>, vector<1x1xf32>,
    } else {
    }
    return
  }
  func.func @transform_0(%arg0: i32, %arg1: memref<1xi32, #tpu.memory_space<smem>>) -> (i32, i32) {
    %c0_i32 = arith.constant 0 : i32
    %c0_i32_0 = arith.constant 0 : i32
    return %arg0, %c0_i32 : i32, i32
  }
  func.func @transform_1(%arg0: i32, %arg1: memref<1xi32, #tpu.memory_space<smem>>) -> (i32, i32) {
    %c0_i32 = arith.constant 0 : i32
    %c0_i32_0 = arith.constant 0 : i32
    %c0_i32_1 = arith.constant 0 : i32
    return %c0_i32, %c0_i32_0 : i32, i32
  }
  func.func @transform_2(%arg0: i32, %arg1: memref<1xi32, #tpu.memory_space<smem>>) -> (i32, i32) {
    %c0_i32 = arith.constant 0 : i32
    %c0_i32_0 = arith.constant 0 : i32
    %c0_i32_1 = arith.constant 0 : i32
    return %c0_i32, %c0_i32_0 : i32, i32
  }
  func.func @transform_3(%arg0: i32, %arg1: memref<1xi32, #tpu.memory_space<smem>>) -> (i32, i32) {
    %c0_i32 = arith.constant 0 : i32
    %c0_i32_0 = arith.constant 0 : i32
    %c0_i32_1 = arith.constant 0 : i32
    return %c0_i32, %c0_i32_0 : i32, i32
  }
  func.func @transform_4(%arg0: i32, %arg1: memref<1xi32, #tpu.memory_space<smem>>) -> (i32, i32) {
    %c0_i32 = arith.constant 0 : i32
    %c0_i32_0 = arith.constant 0 : i32
    %c0_i32_1 = arith.constant 0 : i32
    return %c0_i32, %c0_i32_0 : i32, i32
  }
  func.func @transform_5(%arg0: i32, %arg1: memref<1xi32, #tpu.memory_space<smem>>) -> (i32, i32) {
    %c0_i32 = arith.constant 0 : i32
    %c0_i32_0 = arith.constant 0 : i32
    %c0_i32_1 = arith.constant 0 : i32
    return %c0_i32, %c0_i32_0 : i32, i32
  }
  func.func @transform_6(%arg0: i32, %arg1: memref<1xi32, #tpu.memory_space<smem>>) -> (i32, i32) {
    %c0_i32 = arith.constant 0 : i32
    %c0_i32_0 = arith.constant 0 : i32
    %c0_i32_1 = arith.constant 0 : i32
    return %c0_i32, %c0_i32_0 : i32, i32
  }
  func.func @transform_7(%arg0: i32, %arg1: memref<1xi32, #tpu.memory_space<smem>>) -> (i32, i32) {
    %c0_i32 = arith.constant 0 : i32
    %c0_i32_0 = arith.constant 0 : i32
    %c0_i32_1 = arith.constant 0 : i32
    return %c0_i32, %c0_i32_0 : i32, i32
  }
  func.func @transform_8(%arg0: i32, %arg1: memref<1xi32, #tpu.memory_space<smem>>) -> (i32, i32) {
    %c0_i32 = arith.constant 0 : i32
    %c0_i32_0 = arith.constant 0 : i32
    %c0_i32_1 = arith.constant 0 : i32
    return %c0_i32, %c0_i32_0 : i32, i32
  }
}

</mosaic_0001>

<llo_original>
// kernel: tpu_custom_call.1
$region0: #{tpu_custom_call.1}
  #allocation0 [shape = 'u32[]', space=smem, size = 0x4, offset = 0x4, fixed_abs, tag = 'smem constant byte address 0x4 - core index']
  #allocation1 [shape = 'u32[72,128]{1,0:T(1,128)}', space=vmem, size = 0x9000, scoped, tag = 'internal scratch']
  #allocation2 [shape = 'f32[1,1]{1,0:T(1,128)}', space=vmem, size = 0x200, scoped, tag = 'scratch operand']
  #allocation3 [shape = 'f32[1,1]{1,0:T(1,128)}', space=vmem, size = 0x200, scoped, tag = 'scratch operand']
  #allocation4 [shape = 'f32[1,128]{1,0:T(1,128)}', space=vmem, size = 0x200, scoped, tag = 'scratch operand']
  #allocation5 [shape = 's32[1]{0}', space=sflag, size = 0x4, scoped, tag = 'scoped memory for tpu_custom_call.1']
  #allocation6 [shape = 's32[1]{0:T(128)S(6)}', space=smem, size = 0x200, scoped, tag = 'prefetched SMEM operand 0']
  #allocation7 [shape = 'f32[1,1]{1,0:T(1,128)S(1)}', space=vmem, size = 0x200, scoped, tag = 'scoped memory for tpu_custom_call.1']
  %s0 = inlined_call_operand.<no memory space> [shape: s32[1], index: 0, kind: input, shape index: {}]
  %s1 = inlined_call_operand.vmem [shape: bf16[20,16], index: 1, kind: input, shape index: {}]
  %s2 = inlined_call_operand.vmem [shape: bf16[16,128], index: 2, kind: input, shape index: {}]
  %s3 = inlined_call_operand.vmem [shape: f32[1,128], index: 3, kind: input, shape index: {}]
  %s4 = inlined_call_operand.hbm [shape: bf16[128,128], index: 4, kind: input, shape index: {}]
  %s5 = inlined_call_operand.vmem [shape: f32[1,128], index: 5, kind: input, shape index: {}]
  %s6 = inlined_call_operand.vmem [shape: f32[1,128], index: 6, kind: input, shape index: {}]
  %s7 = inlined_call_operand.vmem [shape: f32[1,128], index: 7, kind: input, shape index: {}]
  %s8 = inlined_call_operand.<no memory space> [shape: f32[1,1], index: 8, kind: input, shape index: {}]
  %s9 = inlined_call_operand.hbm [shape: f32[1,1], index: 9, kind: output, shape index: {}]
  %s10 = sld [smem:[#allocation0]]
  $region77: #{tpu_custom_call.1} parent=0
    _
  %s12 = ssub.s32 1, %s10
  %s13 = scalar_select 0, %s12, %s10
  %14 = sst [smem:[#allocation6]] %s0
  %v15 = vstv %s8
  %16 = vst [vmem:[#allocation7] sm:$0x1] %v15
  $region1: #{tpu_custom_call.1} parent=0
    #allocation8 [shape = 'u8[32768]{0}', space=vmem, size = 0x8000, scoped, tag = 'input window, operand 4, single buffered']
    #allocation9 [shape = 's32[2]{0}', space=sflag, size = 0x8, scoped, tag = 'scoped memory for tpu_custom_call.1']
    #allocation10 [shape = 's32[2]{0}', space=sflag, size = 0x8, scoped, tag = 'scoped memory for tpu_custom_call.1']
    #allocation11 [shape = 'u8[512]{0}', space=vmem, size = 0x400, scoped, tag = 'output window, operand 0, single buffered']
    %17 = vsyncpa [#allocation9], 0
    %18 = vsyncpa [#allocation10], 0
    loop: start=0, step=1, limit=5
    $region2: #{tpu_custom_call.1} parent=1 // loop_pre_header
      _
    $region3: #{tpu_custom_call.1} parent=1 // loop_header
      %s20 = sphi 0, %s24
      %p21 = scmp.ge.s32.totalorder %s20, 5
      %s30 = sphi 0, %s32
      %s33 = sphi 0, %s30
      %s34 = sphi 0, %s33
      %s50 = sphi 0, %s34
      %s54 = sphi 0, %s54
      %s56 = sphi 0, %s54
      %s57 = sphi 0, %s56
      %s71 = sphi 0, %s57
      %s75 = sphi 0, %s75
      %s77 = sphi 0, %s75
      %s78 = sphi 0, %s77
      %s92 = sphi 0, %s78
      %s96 = sphi 0, %s96
      %s98 = sphi 0, %s96
      %s99 = sphi 0, %s98
      %s113 = sphi 0, %s99
      %s117 = sphi 0, %s117
      %s119 = sphi 0, %s117
      %s120 = sphi 0, %s119
      %s134 = sphi 0, %s120
      %s138 = sphi 0, %s138
      %s140 = sphi 0, %s138
      %s141 = sphi 0, %s140
      %s155 = sphi 0, %s141
      %s159 = sphi 0, %s159
      %s161 = sphi 0, %s159
      %s162 = sphi 0, %s161
      %s176 = sphi 0, %s162
      %s180 = sphi 0, %s180
      %s182 = sphi 0, %s180
      %s183 = sphi 0, %s182
      %s197 = sphi 0, %s183
      %s201 = sphi 0, %s201
      %s203 = sphi 0, %s201
      %s204 = sphi 0, %s203
      %s218 = sphi 0, %s204
    $region4: #{tpu_custom_call.1} parent=1 // loop_header_branch
      %23 = sbr.rel (%p21) target = $region8
    $region5: #{tpu_custom_call.1} parent=1 // loop_body
      %s25 = ssub.s32 %s20, 1
      %s26 = ssub.s32 %s20, 2
      %s27 = sadd.s32 %s20, 1
      %s28 = ssub.s32 %s20, %s27
      %p29 = scmp.eq.s32.totalorder %s28, 0
      %s31 = sadd.s32 %s30, 1
      %s32 = scalar_select %p29, %s30, %s31
      %p35 = pneg %p29
      %p36 = scmp.eq.s32.totalorder %s20, 2
      %p37 = por %p35, %p36
      %p38 = scmp.ne.s32.totalorder %s30, %s33
      %p39 = scmp.eq.s32.totalorder %s20, 0
      %p40 = por %p38, %p39
      %p41 = scmp.ne.s32.totalorder %s30, %s33
      %p42 = scmp.eq.s32.totalorder %s25, 2
      %p43 = por %p41, %p42
      %p44 = scmp.ne.s32.totalorder %s33, %s34
      %p45 = scmp.eq.s32.totalorder %s25, 0
      %p46 = por %p44, %p45
      %p47 = scmp.ne.s32.totalorder %s33, %s34
      %p48 = scmp.eq.s32.totalorder %s26, 2
      %p49 = por %p47, %p48
      %p51 = scmp.ne.s32.totalorder %s34, %s50
      %p52 = scmp.eq.s32.totalorder %s26, 0
      %p53 = por %p51, %p52
      %s55 = sadd.s32 %s54, 1
      %p58 = scmp.eq.s32.totalorder %s20, 2
      %p59 = scmp.ne.s32.totalorder %s54, %s56
      %p60 = scmp.eq.s32.totalorder %s20, 0
      %p61 = por %p59, %p60
      %p62 = scmp.ne.s32.totalorder %s54, %s56
      %p63 = scmp.eq.s32.totalorder %s25, 2
      %p64 = por %p62, %p63
      %p65 = scmp.ne.s32.totalorder %s56, %s57
      %p66 = scmp.eq.s32.totalorder %s25, 0
      %p67 = por %p65, %p66
      %p68 = scmp.ne.s32.totalorder %s56, %s57
      %p69 = scmp.eq.s32.totalorder %s26, 2
      %p70 = por %p68, %p69
      %p72 = scmp.ne.s32.totalorder %s57, %s71
      %p73 = scmp.eq.s32.totalorder %s26, 0
      %p74 = por %p72, %p73
      %s76 = sadd.s32 %s75, 1
      %p79 = scmp.eq.s32.totalorder %s20, 2
      %p80 = scmp.ne.s32.totalorder %s75, %s77
      %p81 = scmp.eq.s32.totalorder %s20, 0
      %p82 = por %p80, %p81
      %p83 = scmp.ne.s32.totalorder %s75, %s77
      %p84 = scmp.eq.s32.totalorder %s25, 2
      %p85 = por %p83, %p84
      %p86 = scmp.ne.s32.totalorder %s77, %s78
      %p87 = scmp.eq.s32.totalorder %s25, 0
      %p88 = por %p86, %p87
      %p89 = scmp.ne.s32.totalorder %s77, %s78
      %p90 = scmp.eq.s32.totalorder %s26, 2
      %p91 = por %p89, %p90
      %p93 = scmp.ne.s32.totalorder %s78, %s92
      %p94 = scmp.eq.s32.totalorder %s26, 0
      %p95 = por %p93, %p94
      %s97 = sadd.s32 %s96, 1
      %p100 = scmp.eq.s32.totalorder %s20, 2
      %p101 = scmp.ne.s32.totalorder %s96, %s98
      %p102 = scmp.eq.s32.totalorder %s20, 0
      %p103 = por %p101, %p102
      %p104 = scmp.ne.s32.totalorder %s96, %s98
      %p105 = scmp.eq.s32.totalorder %s25, 2
      %p106 = por %p104, %p105
      %p107 = scmp.ne.s32.totalorder %s98, %s99
      %p108 = scmp.eq.s32.totalorder %s25, 0
      %p109 = por %p107, %p108
      %p110 = scmp.ne.s32.totalorder %s98, %s99
      %p111 = scmp.eq.s32.totalorder %s26, 2
      %p112 = por %p110, %p111
      %p114 = scmp.ne.s32.totalorder %s99, %s113
      %p115 = scmp.eq.s32.totalorder %s26, 0
      %p116 = por %p114, %p115
      %s118 = sadd.s32 %s117, 1
      %p121 = scmp.eq.s32.totalorder %s20, 2
      %p122 = scmp.ne.s32.totalorder %s117, %s119
      %p123 = scmp.eq.s32.totalorder %s20, 0
      %p124 = por %p122, %p123
      %p125 = scmp.ne.s32.totalorder %s117, %s119
      %p126 = scmp.eq.s32.totalorder %s25, 2
      %p127 = por %p125, %p126
      %p128 = scmp.ne.s32.totalorder %s119, %s120
      %p129 = scmp.eq.s32.totalorder %s25, 0
      %p130 = por %p128, %p129
      %p131 = scmp.ne.s32.totalorder %s119, %s120
      %p132 = scmp.eq.s32.totalorder %s26, 2
      %p133 = por %p131, %p132
      %p135 = scmp.ne.s32.totalorder %s120, %s134
      %p136 = scmp.eq.s32.totalorder %s26, 0
      %p137 = por %p135, %p136
      %s139 = sadd.s32 %s138, 1
      %p142 = scmp.eq.s32.totalorder %s20, 2
      %p143 = scmp.ne.s32.totalorder %s138, %s140
      %p144 = scmp.eq.s32.totalorder %s20, 0
      %p145 = por %p143, %p144
      %p146 = scmp.ne.s32.totalorder %s138, %s140
      %p147 = scmp.eq.s32.totalorder %s25, 2
      %p148 = por %p146, %p147
      %p149 = scmp.ne.s32.totalorder %s140, %s141
      %p150 = scmp.eq.s32.totalorder %s25, 0
      %p151 = por %p149, %p150
      %p152 = scmp.ne.s32.totalorder %s140, %s141
      %p153 = scmp.eq.s32.totalorder %s26, 2
      %p154 = por %p152, %p153
      %p156 = scmp.ne.s32.totalorder %s141, %s155
      %p157 = scmp.eq.s32.totalorder %s26, 0
      %p158 = por %p156, %p157
      %s160 = sadd.s32 %s159, 1
      %p163 = scmp.eq.s32.totalorder %s20, 2
      %p164 = scmp.ne.s32.totalorder %s159, %s161
      %p165 = scmp.eq.s32.totalorder %s20, 0
      %p166 = por %p164, %p165
      %p167 = scmp.ne.s32.totalorder %s159, %s161
      %p168 = scmp.eq.s32.totalorder %s25, 2
      %p169 = por %p167, %p168
      %p170 = scmp.ne.s32.totalorder %s161, %s162
      %p171 = scmp.eq.s32.totalorder %s25, 0
      %p172 = por %p170, %p171
      %p173 = scmp.ne.s32.totalorder %s161, %s162
      %p174 = scmp.eq.s32.totalorder %s26, 2
      %p175 = por %p173, %p174
      %p177 = scmp.ne.s32.totalorder %s162, %s176
      %p178 = scmp.eq.s32.totalorder %s26, 0
      %p179 = por %p177, %p178
      %s181 = sadd.s32 %s180, 1
      %p184 = scmp.eq.s32.totalorder %s20, 2
      %p185 = scmp.ne.s32.totalorder %s180, %s182
      %p186 = scmp.eq.s32.totalorder %s20, 0
      %p187 = por %p185, %p186
      %p188 = scmp.ne.s32.totalorder %s180, %s182
      %p189 = scmp.eq.s32.totalorder %s25, 2
      %p190 = por %p188, %p189
      %p191 = scmp.ne.s32.totalorder %s182, %s183
      %p192 = scmp.eq.s32.totalorder %s25, 0
      %p193 = por %p191, %p192
      %p194 = scmp.ne.s32.totalorder %s182, %s183
      %p195 = scmp.eq.s32.totalorder %s26, 2
      %p196 = por %p194, %p195
      %p198 = scmp.ne.s32.totalorder %s183, %s197
      %p199 = scmp.eq.s32.totalorder %s26, 0
      %p200 = por %p198, %p199
      %s202 = sadd.s32 %s201, 1
      %p205 = scmp.eq.s32.totalorder %s20, 2
      %p206 = scmp.ne.s32.totalorder %s201, %s203
      %p207 = scmp.eq.s32.totalorder %s20, 0
      %p208 = por %p206, %p207
      %p209 = scmp.ne.s32.totalorder %s201, %s203
      %p210 = scmp.eq.s32.totalorder %s25, 2
      %p211 = por %p209, %p210
      %p212 = scmp.ne.s32.totalorder %s203, %s204
      %p213 = scmp.eq.s32.totalorder %s25, 0
      %p214 = por %p212, %p213
      %p215 = scmp.ne.s32.totalorder %s203, %s204
      %p216 = scmp.eq.s32.totalorder %s26, 2
      %p217 = por %p215, %p216
      %p219 = scmp.ne.s32.totalorder %s204, %s218
      %p220 = scmp.eq.s32.totalorder %s26, 0
      %p221 = por %p219, %p220
      %p222 = scmp.le.s32.totalorder 1, %s20
      %p223 = scmp.lt.s32.totalorder %s20, 4
      %p224 = pnand %p222, %p223
      %p225 = pneg %p224
      // Predicated region
      $region9: #{tpu_custom_call.1} parent=5 // pred_check
        _
      $region10: #{tpu_custom_call.1} parent=5 // pred_check_branch
        %227 = sbr.rel (%p224) target = $region12
      $region11: #{tpu_custom_call.1} parent=5 // pred_region
        %s228 = ssub.s32 %s20, 1
        // Predicated region
        $region13: #{tpu_custom_call.1} parent=11 // pred_check
          %p229 = pneg %p67
        $region14: #{tpu_custom_call.1} parent=11 // pred_check_branch
          %231 = sbr.rel (%p229) target = $region16
        $region15: #{tpu_custom_call.1} parent=11 // pred_region
          _
        $region16: #{tpu_custom_call.1} parent=11 // pred_fallthru
          _
        // Predicated region
        $region17: #{tpu_custom_call.1} parent=11 // pred_check
          %p232 = pneg %p88
        $region18: #{tpu_custom_call.1} parent=11 // pred_check_branch
          %234 = sbr.rel (%p232) target = $region20
        $region19: #{tpu_custom_call.1} parent=11 // pred_region
          _
        $region20: #{tpu_custom_call.1} parent=11 // pred_fallthru
          _
        // Predicated region
        $region21: #{tpu_custom_call.1} parent=11 // pred_check
          %p235 = pneg %p109
        $region22: #{tpu_custom_call.1} parent=11 // pred_check_branch
          %237 = sbr.rel (%p235) target = $region24
        $region23: #{tpu_custom_call.1} parent=11 // pred_region
          %239 = vsyncadd [#allocation9], 0
          %s240 = sshll.u32 %s4, 4
          %s241 = int_to_ptr.hbm [resolvable:$true] %s240
          %s242 = sshll.u32 [#allocation8], 4
          %s243 = int_to_ptr.vmem [resolvable:$true] %s242
          %248 = dma.hbm_to_vmem [thread:$0]  %s241, 1024, %s243, [#allocation9], 64, 64, 4
        $region24: #{tpu_custom_call.1} parent=11 // pred_fallthru
          _
        // Predicated region
        $region25: #{tpu_custom_call.1} parent=11 // pred_check
          %p249 = pneg %p130
        $region26: #{tpu_custom_call.1} parent=11 // pred_check_branch
          %251 = sbr.rel (%p249) target = $region28
        $region27: #{tpu_custom_call.1} parent=11 // pred_region
          _
        $region28: #{tpu_custom_call.1} parent=11 // pred_fallthru
          _
        // Predicated region
        $region29: #{tpu_custom_call.1} parent=11 // pred_check
          %p252 = pneg %p151
        $region30: #{tpu_custom_call.1} parent=11 // pred_check_branch
          %254 = sbr.rel (%p252) target = $region32
        $region31: #{tpu_custom_call.1} parent=11 // pred_region
          _
        $region32: #{tpu_custom_call.1} parent=11 // pred_fallthru
          _
        // Predicated region
        $region33: #{tpu_custom_call.1} parent=11 // pred_check
          %p255 = pneg %p172
        $region34: #{tpu_custom_call.1} parent=11 // pred_check_branch
          %257 = sbr.rel (%p255) target = $region36
        $region35: #{tpu_custom_call.1} parent=11 // pred_region
          _
        $region36: #{tpu_custom_call.1} parent=11 // pred_fallthru
          _
        // Predicated region
        $region37: #{tpu_custom_call.1} parent=11 // pred_check
          %p258 = pneg %p193
        $region38: #{tpu_custom_call.1} parent=11 // pred_check_branch
          %260 = sbr.rel (%p258) target = $region40
        $region39: #{tpu_custom_call.1} parent=11 // pred_region
          _
        $region40: #{tpu_custom_call.1} parent=11 // pred_fallthru
          _
      $region12: #{tpu_custom_call.1} parent=5 // pred_fallthru
        _
      %p261 = scmp.lt.s32.totalorder %s20, 3
      // Predicated region
      $region41: #{tpu_custom_call.1} parent=5 // pred_check
        %p262 = pneg %p261
      $region42: #{tpu_custom_call.1} parent=5 // pred_check_branch
        %264 = sbr.rel (%p262) target = $region44
      $region43: #{tpu_custom_call.1} parent=5 // pred_region
        // Predicated region
        $region45: #{tpu_custom_call.1} parent=43 // pred_check
          %p265 = pneg %p40
        $region46: #{tpu_custom_call.1} parent=43 // pred_check_branch
          %267 = sbr.rel (%p265) target = $region48
        $region47: #{tpu_custom_call.1} parent=43 // pred_region
          %p268 = scmp.lt.s32.totalorder %s20, 2
          %s269 = scalar_select %p268, %s20, 2
          %s270 = smul.addr %s269, 4
          %s271 = scalar_lea.vmem %s1, %s270
        $region48: #{tpu_custom_call.1} parent=43 // pred_fallthru
          _
      $region44: #{tpu_custom_call.1} parent=5 // pred_fallthru
        _
      %p272 = scmp.le.s32.totalorder 1, %s20
      %p273 = scmp.lt.s32.totalorder %s20, 4
      %p274 = pnand %p272, %p273
      %p275 = pneg %p274
      // Predicated region
      $region49: #{tpu_custom_call.1} parent=5 // pred_check
        _
      $region50: #{tpu_custom_call.1} parent=5 // pred_check_branch
        %277 = sbr.rel (%p274) target = $region52
      $region51: #{tpu_custom_call.1} parent=5 // pred_region
        %s278 = ssub.s32 %s20, 1
        // Predicated region
        $region53: #{tpu_custom_call.1} parent=51 // pred_check
          %p279 = pneg %p109
        $region54: #{tpu_custom_call.1} parent=51 // pred_check_branch
          %281 = sbr.rel (%p279) target = $region56
        $region55: #{tpu_custom_call.1} parent=51 // pred_region
          %283 = dma.done [#allocation9], 1024
        $region56: #{tpu_custom_call.1} parent=51 // pred_fallthru
          _
        %p284 = scmp.lt.s32.totalorder %s25, 2
        %s285 = scalar_select %p284, %s25, 2
        %s286 = smul.addr %s285, 4
        %s287 = scalar_lea.vmem %s1, %s286
        %p288 = pneg %p46
        %p289 = pneg %p43
        %p290 = pneg %p67
        %p291 = pneg %p64
        %p292 = pneg %p88
        %p293 = pneg %p85
        %p294 = pneg %p109
        %p295 = pneg %p106
        %p296 = pneg %p130
        %p297 = pneg %p127
        %p298 = pneg %p151
        %p299 = pneg %p148
        %p300 = pneg %p172
        %p301 = pneg %p169
        %p302 = pneg %p193
        %p303 = pneg %p190
        %p304 = pneg %p214
        %p305 = pneg %p211
        %p306 = scmp.lt.s32.totalorder %s25, 2
        %s307 = scalar_select %p306, %s25, 2
        %s308 = smul.addr %s307, 4
        %s309 = scalar_lea.vmem %s1, %s308
        %p311 = scmp.eq.s32.totalorder %s25, 0
        // Predicated region
        $region57: #{tpu_custom_call.1} parent=51 // pred_check
          %p312 = pneg %p311
        $region58: #{tpu_custom_call.1} parent=51 // pred_check_branch
          %314 = sbr.rel (%p312) target = $region60
        $region59: #{tpu_custom_call.1} parent=51 // pred_region
          %vm315 = vcmask 0
          %316 = vst.msk [vmem:[#allocation2] sm:$0x1] %vm315, -inf
          %317 = vst.msk [vmem:[#allocation3] sm:$0x1] %vm315, 0.0
          %318 = vst [vmem:[#allocation4] sm:$0x1] 0.0
        $region60: #{tpu_custom_call.1} parent=51 // pred_fallthru
          _
        %s319 = smul.u32 %s25, 8
        %v320 = vlaneseq
        %v321 = vshrl.u32 %v320, 7
        %v322 = vstv %s319
        %v323 = vadd.s32 %v322, %v321
        %s324 = sld [smem:[#allocation6]]
        %v325 = vstv %s324
        %vm326 = vcmp.lt.s32.totalorder %v323, %v325
        %v327 = vld [vmem:[%s309] sm:$0xf]
        %v328 = vld [vmem:[%s2] sm:$0xf]
        %v329 = vld [vmem:[%s2 + $0x4] sm:$0xf]
        %v330 = vld [vmem:[%s3] sm:$0x1]
        %v332 = vperm.slane %v330, 0
        %v336 = vunpack.c.l.b16 %v328
        %v337 = vunpack.c.l.b16 %v329
        %v338 = vpack.c.b16 %v337, %v336
        %vm340 = vcmask 130048
        %v342 = vsel %vm340, %v327, 0
        %344 = vmatpush.bf16.msra.mxu0 0
        %345 = vmatpush.bf16.msra.mxu0 0
        %346 = vmatpush.bf16.msra.mxu0 0
        %347 = vmatpush.bf16.msra.mxu0 0
        %348 = vmatpush.bf16.msra.mxu0 0
        %349 = vmatpush.bf16.msra.mxu0 0
        %350 = vmatpush.bf16.msra.mxu0 0
        %351 = vmatpush.bf16.msra.mxu0 %v338
        %352 = vmatmul.bf16.gmra.mxu0 %v342
        %v353 = vpop.f32.mrf.mxu0
        %v354 = vadd.f32 %v332, %v353
        %v355 = vpop.f32.mrf.mxu0
        %356 = vdwg.mxu0
        %v357 = vmax.f32 %v354, 0.0
        %v358 = vsel %vm326, 1, 0
        %vm359 = vcmp.eq.s32.totalorder %v358, 1
        %v360 = vsel %vm359, %v357, 0.0
        %v361 = vpack.c.bf16 %v360, %v360
        %v362 = vld [vmem:[#allocation8] sm:$0xf]
        %v363 = vld [vmem:[#allocation8 + $0x4] sm:$0xf]
        %v364 = vld [vmem:[#allocation8 + $0x8] sm:$0xf]
        %v365 = vld [vmem:[#allocation8 + $0xc] sm:$0xf]
        %v366 = vld [vmem:[#allocation8 + $0x10] sm:$0xf]
        %v367 = vld [vmem:[#allocation8 + $0x14] sm:$0xf]
        %v368 = vld [vmem:[#allocation8 + $0x18] sm:$0xf]
        %v369 = vld [vmem:[#allocation8 + $0x1c] sm:$0xf]
        %v370 = vld [vmem:[#allocation8 + $0x20] sm:$0xf]
        %v371 = vld [vmem:[#allocation8 + $0x24] sm:$0xf]
        %v372 = vld [vmem:[#allocation8 + $0x28] sm:$0xf]
        %v373 = vld [vmem:[#allocation8 + $0x2c] sm:$0xf]
        %v374 = vld [vmem:[#allocation8 + $0x30] sm:$0xf]
        %v375 = vld [vmem:[#allocation8 + $0x34] sm:$0xf]
        %v376 = vld [vmem:[#allocation8 + $0x38] sm:$0xf]
        %v377 = vld [vmem:[#allocation8 + $0x3c] sm:$0xf]
        %v378 = vld [vmem:[%s5] sm:$0x1]
        %v380 = vperm.slane %v378, 0
        %v398 = vunpack.c.l.b16 %v362
        %v399 = vunpack.c.l.b16 %v363
        %v400 = vunpack.c.l.b16 %v364
        %v401 = vunpack.c.l.b16 %v365
        %v402 = vunpack.c.l.b16 %v366
        %v403 = vunpack.c.l.b16 %v367
        %v404 = vunpack.c.l.b16 %v368
        %v405 = vunpack.c.l.b16 %v369
        %v406 = vunpack.c.l.b16 %v370
        %v407 = vunpack.c.l.b16 %v371
        %v408 = vunpack.c.l.b16 %v372
        %v409 = vunpack.c.l.b16 %v373
        %v410 = vunpack.c.l.b16 %v374
        %v411 = vunpack.c.l.b16 %v375
        %v412 = vunpack.c.l.b16 %v376
        %v413 = vunpack.c.l.b16 %v377
        %v414 = vpack.c.b16 %v399, %v398
        %v415 = vpack.c.b16 %v401, %v400
        %v416 = vpack.c.b16 %v403, %v402
        %v417 = vpack.c.b16 %v405, %v404
        %v418 = vpack.c.b16 %v407, %v406
        %v419 = vpack.c.b16 %v409, %v408
        %v420 = vpack.c.b16 %v411, %v410
        %v421 = vpack.c.b16 %v413, %v412
        %430 = vmatpush.bf16.msra.mxu0 %v421
        %431 = vmatpush.bf16.msra.mxu0 %v420
        %432 = vmatpush.bf16.msra.mxu0 %v419
        %433 = vmatpush.bf16.msra.mxu0 %v418
        %434 = vmatpush.bf16.msra.mxu0 %v417
        %435 = vmatpush.bf16.msra.mxu0 %v416
        %436 = vmatpush.bf16.msra.mxu0 %v415
        %437 = vmatpush.bf16.msra.mxu0 %v414
        %438 = vmatmul.bf16.gmra.mxu0 %v361
        %v439 = vpop.f32.mrf.mxu0
        %v440 = vadd.f32 %v380, %v439
        %v441 = vpop.f32.mrf.mxu0
        %442 = vdwg.mxu0
        %v443 = vtanh.pop %v440
        %v444 = vld [vmem:[%s6] sm:$0x1]
        %v446 = vperm.slane %v444, 0
        %v448 = vmul.f32 %v443, %v446
        %449 = vadd.xlane.f32.xlu0 %v448
        %v450 = vpop.xlane.xlu0 %449
        %v451 = vsel %vm326, %v450, -inf
        %v452 = vld [vmem:[#allocation2] sm:$0x1]
        %v453 = vrot.slane %v451, 4
        %v454 = vmax.f32 %v451, %v453
        %v455 = vrot.slane %v454, 2
        %v456 = vmax.f32 %v454, %v455
        %v457 = vrot.slane %v456, 1
        %v458 = vmax.f32 %v456, %v457
        %v459 = vmax.f32 %v452, %v458
        %v460 = vsub.f32 %v452, %v459
        %v461 = vmul.f32 %v460, 1.442695
        %v462 = vpow.pop %v461
        %v464 = vperm.slane %v459, 0
        %v466 = vsub.f32 %v451, %v464
        %v467 = vmul.f32 %v466, 1.442695
        %v468 = vpow.pop %v467
        %v469 = vld [vmem:[#allocation3] sm:$0x1]
        %v470 = vmul.f32 %v462, %v469
        %vm471 = vcmask 7168
        %v472 = vsel %vm471, %v468, 0.0
        %v473 = vrot.slane %v472, 4
        %v474 = vadd.f32 %v472, %v473
        %v475 = vrot.slane %v474, 2
        %v476 = vadd.f32 %v474, %v475
        %v477 = vrot.slane %v476, 1
        %v478 = vadd.f32 %v476, %v477
        %v479 = vadd.f32 %v470, %v478
        %vm480 = vcmask 0
        %481 = vst.msk [vmem:[#allocation3] sm:$0x1] %vm480, %v479
        %v482 = vld [vmem:[#allocation4] sm:$0x1]
        %484 = vset.pattern.permute.xlu0 0
        %485 = vperm.xlu0 %484, %v462
        %v486 = vpop.permute.xlu0 %485
        %v488 = vperm.slane %v486, 0
        %v489 = vmul.f32 %v488, %v482
        %491 = vset.pattern.permute.xlu0 0
        %492 = vperm.xlu0 %491, %v468
        %v493 = vpop.permute.xlu0 %492
        %v495 = vmul.f32 %v493, %v360
        %v496 = vrot.slane %v495, 4
        %v497 = vadd.f32 %v495, %v496
        %v498 = vrot.slane %v497, 2
        %v499 = vadd.f32 %v497, %v498
        %v500 = vrot.slane %v499, 1
        %v501 = vadd.f32 %v499, %v500
        %v502 = vadd.f32 %v489, %v501
        %503 = vst [vmem:[#allocation4] sm:$0x1] %v502
        %504 = vst.msk [vmem:[#allocation2] sm:$0x1] %vm480, %v459
        %p505 = scmp.eq.s32.totalorder %s25, 2
        // Predicated region
        $region61: #{tpu_custom_call.1} parent=51 // pred_check
          %p506 = pneg %p505
        $region62: #{tpu_custom_call.1} parent=51 // pred_check_branch
          %508 = sbr.rel (%p506) target = $region64
        $region63: #{tpu_custom_call.1} parent=51 // pred_region
          %v509 = vld [vmem:[#allocation4] sm:$0x1]
          %v510 = vld [vmem:[#allocation3] sm:$0x1]
          %512 = vset.pattern.permute.xlu0 0
          %513 = vperm.xlu0 %512, %v510
          %v514 = vpop.permute.xlu0 %513
          %v516 = vperm.slane %v514, 0
          %v517 = vrcp.pop %v516
          %v518 = vmul.f32 %v516, %v517
          %v519 = vsub.f32 1.0, %v518
          %v520 = vmul.f32 %v517, %v519
          %v521 = vadd.f32 %v517, %v520
          %vm522 = vweird.f32 %v516
          %vm523 = vweird.f32 %v517
          %vm524 = vmor %vm522, %vm523
          %v525 = vsel %vm524, %v517, %v521
          %v526 = vand.u32 2147483647, %v516
          %vm527 = vcmp.eq.f32.partialorder %v526, 8.507059e+37
          %v528 = vand.u32 %v516, 2147483648
          %v529 = vor.u32 1.1754944e-38, %v528
          %v530 = vsel %vm527, %v529, %v525
          %v531 = vmul.f32 %v509, %v530
          %v532 = vld [vmem:[%s7] sm:$0x1]
          %v533 = vmul.f32 %v531, %v532
          %vm534 = vcmask 1040384
          %v535 = vsel %vm534, %v533, 0.0
          %536 = vadd.xlane.f32.xlu0 %v535
          %v537 = vpop.xlane.xlu0 %536
          %v538 = vld [vmem:[#allocation7] sm:$0x1]
          %v539 = vadd.f32 %v537, %v538
          %540 = vst.msk [vmem:[#allocation11] sm:$0x1] %vm480, %v539
        $region64: #{tpu_custom_call.1} parent=51 // pred_fallthru
          _
        // Predicated region
        $region65: #{tpu_custom_call.1} parent=51 // pred_check
          %p541 = pneg %p211
        $region66: #{tpu_custom_call.1} parent=51 // pred_check_branch
          %543 = sbr.rel (%p541) target = $region68
        $region67: #{tpu_custom_call.1} parent=51 // pred_region
          %545 = vsyncadd [#allocation10], 0
          %s547 = sshll.u32 [#allocation11], 4
          %s548 = int_to_ptr.vmem [resolvable:$true] %s547
          %s549 = sshll.u32 %s9, 4
          %s550 = int_to_ptr.hbm [resolvable:$true] %s549
          %552 = dma.vmem_to_hbm [thread:$0]  %s548, 16, %s550, [#allocation10]
        $region68: #{tpu_custom_call.1} parent=51 // pred_fallthru
          _
        // Predicated region
        $region69: #{tpu_custom_call.1} parent=51 // pred_check
          %p553 = pneg %p211
        $region70: #{tpu_custom_call.1} parent=51 // pred_check_branch
          %555 = sbr.rel (%p553) target = $region72
        $region71: #{tpu_custom_call.1} parent=51 // pred_region
          %557 = dma.done [#allocation10], 16
        $region72: #{tpu_custom_call.1} parent=51 // pred_fallthru
          _
      $region52: #{tpu_custom_call.1} parent=5 // pred_fallthru
        _
      %p558 = scmp.le.s32.totalorder 2, %s20
      // Predicated region
      $region73: #{tpu_custom_call.1} parent=5 // pred_check
        %p559 = pneg %p558
      $region74: #{tpu_custom_call.1} parent=5 // pred_check_branch
        %561 = sbr.rel (%p559) target = $region76
      $region75: #{tpu_custom_call.1} parent=5 // pred_region
        %s562 = ssub.s32 %s20, 2
      $region76: #{tpu_custom_call.1} parent=5 // pred_fallthru
        _
    $region6: #{tpu_custom_call.1} parent=1 // loop_footer
      %s24 = sadd.s32 1, %s20
    $region7: #{tpu_custom_call.1} parent=1 // loop_footer_branch
      %19 = sbr.rel target = $region3
    $region8: #{tpu_custom_call.1} parent=1 // loop_exit
      _
    %563 = vsyncpa [#allocation9], 1
    %s564 = scalar_lea.sflag [#allocation9], 1
    %565 = vsyncpa %s564, 1
    %566 = vsyncpa [#allocation10], 1
    %s567 = scalar_lea.sflag [#allocation10], 1
    %568 = vsyncpa %s567, 1

</llo_original>
